<compile_context>
chip_gen: v7x
topology: tpu7x:2x2x1
jax: 0.10.0
libtpu: 0.0.40
codegen_flags: <defaults>
</compile_context>

<pallas_src>
import functools

import numpy as np
import jax
import jax.numpy as jnp
from jax.experimental import pallas as pl
from jax.experimental.pallas import tpu as pltpu


_NEG_PAD = -1e30        # finite "minus infinity" used only inside f32 kernel math
_SMALL_D_MAX = 16       # threshold for the sublane (small-D) layout


# ---------------------------------------------------------------------------
# Kernels
# ---------------------------------------------------------------------------
def _sparsemax_sublane_kernel(x_ref, o_ref, *, d):
    """Sparsemax along the SUBLANE (first) axis of a (d, LANE_TILE) tile."""
    z = x_ref[...].astype(jnp.float32)
    z = z - jnp.max(z, axis=0, keepdims=True)            # shift by max (as in torch fwd)

    # j_idx[j, :] == j  (sublane index) -- used for stable tie-breaking.
    j_idx = jax.lax.broadcasted_iota(jnp.int32, z.shape, 0)

    rank = jnp.ones_like(z)       # rank_j = 1 + #{i : i comes before j}
    csum = z                      # csum_j = z_j + sum_{i before j} z_i
    for i in range(d):            # static, tiny unroll (d <= 16)
        zi = z[i:i + 1, :]        # (1, LT), broadcast over sublanes
        # NOTE: exact float equality is intentional -- it emulates a *stable*
        # descending sort; ties produce identical sparsemax outputs.
        before = (zi > z) | ((zi == z) & (i < j_idx))
        bf = before.astype(jnp.float32)
        rank = rank + bf
        csum = csum + bf * zi

    cond = rank * z > (csum - 1.0)                        # support condition
    k_star = jnp.sum(cond.astype(jnp.float32), axis=0, keepdims=True)
    sum_top = jnp.sum(jnp.where(cond, z, 0.0), axis=0, keepdims=True)
    tau = (sum_top - 1.0) / k_star                        # k_star >= 1 always

    o_ref[...] = jnp.maximum(z - tau, 0.0).astype(o_ref.dtype)


def _sparsemax_lane_kernel(x_ref, o_ref, *, d_valid, chunk):
    """Sparsemax along the LANE (last) axis of a (TR, Dp) tile.

    rank / cumulative sums accumulate per candidate-axis chunk via batched MXU
    contractions against the 0/1 "comes-before" matrix, keeping the 3-D
    temporary bounded by TR*chunk*Dp*4 bytes and moving the O(D^2) reductions
    off the (saturated) VPU.
    """
    z = x_ref[...].astype(jnp.float32)
    tr, dp = z.shape

    if d_valid < dp:
        # Padded lanes were zero-filled by the wrapper; mask them here (finite,
        # so fp16/bf16 inputs never see +/-inf arithmetic).
        lane = jax.lax.broadcasted_iota(jnp.int32, (tr, dp), 1)
        z = jnp.where(lane < d_valid, z, _NEG_PAD)

    z = z - jnp.max(z, axis=-1, keepdims=True)

    rank = jnp.ones_like(z)       # rank_j = 1 + #{i : i comes before j}
    csum = z                      # csum_j = z_j + sum_{i before j} z_i
    zj = z[:, None, :]                                            # (TR, 1, Dp)
    for i0 in range(0, dp, chunk):                                # static unroll
        c = min(chunk, dp - i0)
        zc = z[:, i0:i0 + c]                                      # (TR, C) candidates
        zi = zc[:, :, None]                                       # (TR, C, 1)
        ii = jax.lax.broadcasted_iota(jnp.int32, (c, dp), 0) + i0
        jj = jax.lax.broadcasted_iota(jnp.int32, (c, dp), 1)
        tie = (ii < jj)[None, :, :]
        # NOTE: exact float equality is intentional (stable sort emulation).
        before = ((zi > zj) | ((zi == zj) & tie)).astype(jnp.float32)  # (TR, C, Dp)

        dims = (((2,), (1,)), ((0,), (0,)))     # contract C, batch over TR
        r_inc = jax.lax.dot_general(            # ones(1,C) @ before -> counts
            jnp.ones((tr, 1, c), jnp.float32), before, dims,
            precision=jax.lax.Precision.HIGHEST,
            preferred_element_type=jnp.float32)
        c_inc = jax.lax.dot_general(            # z(1,C) @ before -> partial sums
            zc[:, None, :], before, dims,
            precision=jax.lax.Precision.HIGHEST,
            preferred_element_type=jnp.float32)
        rank = rank + r_inc[:, 0, :]
        csum = csum + c_inc[:, 0, :]

    cond = rank * z > (csum - 1.0)
    k_star = jnp.sum(cond.astype(jnp.float32), axis=-1, keepdims=True)
    sum_top = jnp.sum(jnp.where(cond, z, 0.0), axis=-1, keepdims=True)
    tau = (sum_top - 1.0) / k_star

    o_ref[...] = jnp.maximum(z - tau, 0.0).astype(o_ref.dtype)


# ---------------------------------------------------------------------------
# Wrapper
# ---------------------------------------------------------------------------
def _round_down(x, m):
    return (x // m) * m


def _choose_lane_path_tiles(dp):
    # Keep the dominant (TR, CHUNK, Dp) f32 temporary around <= 4 MiB so the
    # kernel fits v5e's 16 MiB scoped default and v7x's 64 MiB physical VMEM
    # with headroom, while keeping the row tile large (8..64) to amortize the
    # ~0.35 us/step grid overhead.
    budget = 1 << 20                                    # 4 MiB of f32 elements
    tr = max(8, min(64, _round_down(budget // (dp * dp), 8)))
    chunk = max(128, min(dp, _round_down(budget // (tr * dp), 128)))
    return tr, chunk


@functools.partial(jax.jit, static_argnames=("dim", "k"))
def sparsemax_topk(x, dim=0, k=100):
    """Pallas implementation of SparsemaxFunctionTopK.forward(x, dim, k)."""
    del k  # top-k in the reference is only an acceleration; output == exact sparsemax.
    ndim = x.ndim
    dim = dim % ndim
    d = x.shape[dim]

    if d <= _SMALL_D_MAX:
        # ---- small-D path: sparsemax axis on sublanes, rows on lanes --------
        perm = [dim] + [i for i in range(ndim) if i != dim]
        xt = jnp.transpose(x, perm)                      # (D, ...)
        rest = xt.shape[1:]
        r = int(np.prod(rest)) if rest else 1
        x2 = xt.reshape(d, r)

        lt = 256 if r <= 2048 else 1024                  # >=2 grid steps on v7x for small R
        rp = ((r + lt - 1) // lt) * lt
        if rp != r:
            x2 = jnp.pad(x2, ((0, 0), (0, rp - r)))      # columns are independent

        out = pl.pallas_call(
            functools.partial(_sparsemax_sublane_kernel, d=d),
            out_shape=jax.ShapeDtypeStruct((d, rp), x.dtype),
            grid=(rp // lt,),
            in_specs=[pl.BlockSpec((d, lt), lambda i: (0, i))],
            out_specs=pl.BlockSpec((d, lt), lambda i: (0, i)),
            compiler_params=pltpu.CompilerParams(
                dimension_semantics=("parallel",)),
        )(x2)

        out = out[:, :r].reshape((d,) + rest)
        inv_perm = [0] * ndim
        for i, p in enumerate(perm):
            inv_perm[p] = i
        return jnp.transpose(out, inv_perm)

    # ---- general path: rows on sublanes, sparsemax axis on lanes ------------
    perm = [i for i in range(ndim) if i != dim] + [dim]
    xt = jnp.transpose(x, perm)
    lead = xt.shape[:-1]
    r = int(np.prod(lead)) if lead else 1
    x2 = xt.reshape(r, d)

    dp = ((d + 127) // 128) * 128
    tr, chunk = _choose_lane_path_tiles(dp)
    rp = ((r + tr - 1) // tr) * tr
    if rp != r or dp != d:
        # Zero pad only: padded lanes are masked inside the kernel, padded rows
        # are independent and sliced off (no full()+at[].set, no +/-inf).
        x2 = jnp.pad(x2, ((0, rp - r), (0, dp - d)))

    out = pl.pallas_call(
        functools.partial(_sparsemax_lane_kernel, d_valid=d, chunk=chunk),
        out_shape=jax.ShapeDtypeStruct((rp, dp), x.dtype),
        grid=(rp // tr,),
        in_specs=[pl.BlockSpec((tr, dp), lambda i: (i, 0))],
        out_specs=pl.BlockSpec((tr, dp), lambda i: (i, 0)),
        compiler_params=pltpu.CompilerParams(
            dimension_semantics=("parallel",),
            vmem_limit_bytes=48 * 1024 * 1024),
    )(x2)

    out = out[:r, :d].reshape(lead + (d,))
    inv_perm = [0] * ndim
    for i, p in enumerate(perm):
        inv_perm[p] = i
    return jnp.transpose(out, inv_perm)


class SparsemaxTopK:
    """JAX/Pallas counterpart of the PyTorch nn.Module (no learned parameters)."""

    def __init__(self, dim=0, k=100):
        self.dim = dim
        self.k = k

    def __call__(self, x):
        return sparsemax_topk(x, dim=self.dim, k=self.k)


def _sparsemax_reference(x, dim):
    """Pure-JAX sort-based reference, mirrors the PyTorch forward exactly."""
    z = x - jnp.max(x, axis=dim, keepdims=True)
    zs = -jnp.sort(-z, axis=dim)                          # descending sort
    cs = jnp.cumsum(zs, axis=dim) - 1.0
    d = x.shape[dim]
    view = [1] * x.ndim
    view[dim] = d
    rho = jnp.arange(1, d + 1, dtype=x.dtype).reshape(view)
    support = rho * zs > cs
    supp_size = jnp.sum(support, axis=dim, keepdims=True)
    tau = jnp.take_along_axis(cs, supp_size - 1, axis=dim) / supp_size.astype(x.dtype)
    return jnp.clip(z - tau, 0.0, None)


if __name__ == "__main__":
    key = jax.random.PRNGKey(0)
    k1, k2 = jax.random.split(key)

    # PyTorch conv-style NCHW activations; sparsemax over channel axis (D=4,
    # exercises the small-D / sublane path).
    x_small = jax.random.normal(k1, (2, 4, 16, 16), dtype=jnp.float32)
    module = SparsemaxTopK(dim=1, k=100)
    out_small = jax.block_until_ready(module(x_small))
    ref_small = _sparsemax_reference(x_small, dim=1)
    np.testing.assert_allclose(np.asarray(out_small), np.asarray(ref_small),
                               atol=1e-5, rtol=1e-5)
    np.testing.assert_allclose(np.asarray(jnp.sum(out_small, axis=1)),
                               np.ones((2, 16, 16), np.float32), atol=1e-5)

    # Larger feature axis -> general (lane / MXU) path (D=300, non-multiple of 128).
    x_big = jax.random.normal(k2, (8, 3, 300), dtype=jnp.float32)
    out_big = jax.block_until_ready(sparsemax_topk(x_big, dim=2, k=100))
    ref_big = _sparsemax_reference(x_big, dim=2)
    np.testing.assert_allclose(np.asarray(out_big), np.asarray(ref_big),
                               atol=1e-5, rtol=1e-5)
    np.testing.assert_allclose(np.asarray(jnp.sum(out_big, axis=2)),
                               np.ones((8, 3), np.float32), atol=1e-5)

    print("KERNEL_OK")
</pallas_src>

<mosaic_0001>
module attributes {stable_mosaic.version = 11 : i64} {
  func.func @_sparsemax_sublane_kernel(%arg0: i32, %arg1: memref<4x256xf32, #tpu.memory_space<vmem>>, %arg2: memref<4x256xf32, #tpu.memory_space<vmem>>) attributes {dimension_semantics = [#tpu.dimension_semantics<parallel>], iteration_bounds = array<i64: 2>, scalar_prefetch = 0 : i64, scratch_operands = 0 : i64, tpu.core_type = #tpu.core_type<tc>, window_params = [{transform_indices = @transform_0, window_bounds = array<i64: 4, 256>}, {transform_indices = @transform_1, window_bounds = array<i64: 4, 256>}]} {
    %c0 = arith.constant 0 : index
    %c0_0 = arith.constant 0 : index
    %0 = vector.load %arg1[%c0, %c0_0] : memref<4x256xf32, #tpu.memory_space<vmem>>, vector<4x256xf32>
    %cst = arith.constant dense<0xFF800000> : vector<256xf32>
    %1 = vector.multi_reduction <maximumf>, %0, %cst [0] : vector<4x256xf32> to vector<256xf32>
    %2 = vector.shape_cast %1 : vector<256xf32> to vector<1x256xf32>
    %3 = vector.broadcast %2 : vector<1x256xf32> to vector<4x256xf32>
    %4 = arith.subf %0, %3 : vector<4x256xf32>
    %5 = tpu.iota {dimensions = array<i32: 0>} : vector<4x256xi32>
    %cst_1 = arith.constant 1.000000e+00 : f32
    %6 = vector.broadcast %cst_1 : f32 to vector<4x256xf32>
    %7 = vector.extract_strided_slice %4 {offsets = [0, 0], sizes = [1, 256], strides = [1, 1]} : vector<4x256xf32> to vector<1x256xf32>
    %8 = vector.broadcast %7 : vector<1x256xf32> to vector<4x256xf32>
    %9 = arith.cmpf ogt, %8, %4 : vector<4x256xf32>
    %10 = vector.broadcast %7 : vector<1x256xf32> to vector<4x256xf32>
    %11 = arith.cmpf oeq, %10, %4 : vector<4x256xf32>
    %c0_i32 = arith.constant 0 : i32
    %12 = vector.broadcast %c0_i32 : i32 to vector<4x256xi32>
    %13 = arith.cmpi sgt, %5, %12 : vector<4x256xi32>
    %14 = arith.andi %11, %13 : vector<4x256xi1>
    %15 = arith.ori %9, %14 : vector<4x256xi1>
    %16 = arith.extui %15 : vector<4x256xi1> to vector<4x256xi32>
    %17 = arith.sitofp %16 : vector<4x256xi32> to vector<4x256xf32>
    %18 = arith.addf %6, %17 : vector<4x256xf32>
    %19 = vector.broadcast %7 : vector<1x256xf32> to vector<4x256xf32>
    %20 = arith.mulf %17, %19 : vector<4x256xf32>
    %21 = arith.addf %4, %20 : vector<4x256xf32>
    %22 = vector.extract_strided_slice %4 {offsets = [1, 0], sizes = [1, 256], strides = [1, 1]} : vector<4x256xf32> to vector<1x256xf32>
    %23 = vector.broadcast %22 : vector<1x256xf32> to vector<4x256xf32>
    %24 = arith.cmpf ogt, %23, %4 : vector<4x256xf32>
    %25 = vector.broadcast %22 : vector<1x256xf32> to vector<4x256xf32>
    %26 = arith.cmpf oeq, %25, %4 : vector<4x256xf32>
    %c1_i32 = arith.constant 1 : i32
    %27 = vector.broadcast %c1_i32 : i32 to vector<4x256xi32>
    %28 = arith.cmpi sgt, %5, %27 : vector<4x256xi32>
    %29 = arith.andi %26, %28 : vector<4x256xi1>
    %30 = arith.ori %24, %29 : vector<4x256xi1>
    %31 = arith.extui %30 : vector<4x256xi1> to vector<4x256xi32>
    %32 = arith.sitofp %31 : vector<4x256xi32> to vector<4x256xf32>
    %33 = arith.addf %18, %32 : vector<4x256xf32>
    %34 = vector.broadcast %22 : vector<1x256xf32> to vector<4x256xf32>
    %35 = arith.mulf %32, %34 : vector<4x256xf32>
    %36 = arith.addf %21, %35 : vector<4x256xf32>
    %37 = vector.extract_strided_slice %4 {offsets = [2, 0], sizes = [1, 256], strides = [1, 1]} : vector<4x256xf32> to vector<1x256xf32>
    %38 = vector.broadcast %37 : vector<1x256xf32> to vector<4x256xf32>
    %39 = arith.cmpf ogt, %38, %4 : vector<4x256xf32>
    %40 = vector.broadcast %37 : vector<1x256xf32> to vector<4x256xf32>
    %41 = arith.cmpf oeq, %40, %4 : vector<4x256xf32>
    %c2_i32 = arith.constant 2 : i32
    %42 = vector.broadcast %c2_i32 : i32 to vector<4x256xi32>
    %43 = arith.cmpi sgt, %5, %42 : vector<4x256xi32>
    %44 = arith.andi %41, %43 : vector<4x256xi1>
    %45 = arith.ori %39, %44 : vector<4x256xi1>
    %46 = arith.extui %45 : vector<4x256xi1> to vector<4x256xi32>
    %47 = arith.sitofp %46 : vector<4x256xi32> to vector<4x256xf32>
    %48 = arith.addf %33, %47 : vector<4x256xf32>
    %49 = vector.broadcast %37 : vector<1x256xf32> to vector<4x256xf32>
    %50 = arith.mulf %47, %49 : vector<4x256xf32>
    %51 = arith.addf %36, %50 : vector<4x256xf32>
    %52 = vector.extract_strided_slice %4 {offsets = [3, 0], sizes = [1, 256], strides = [1, 1]} : vector<4x256xf32> to vector<1x256xf32>
    %53 = vector.broadcast %52 : vector<1x256xf32> to vector<4x256xf32>
    %54 = arith.cmpf ogt, %53, %4 : vector<4x256xf32>
    %55 = vector.broadcast %52 : vector<1x256xf32> to vector<4x256xf32>
    %56 = arith.cmpf oeq, %55, %4 : vector<4x256xf32>
    %c3_i32 = arith.constant 3 : i32
    %57 = vector.broadcast %c3_i32 : i32 to vector<4x256xi32>
    %58 = arith.cmpi sgt, %5, %57 : vector<4x256xi32>
    %59 = arith.andi %56, %58 : vector<4x256xi1>
    %60 = arith.ori %54, %59 : vector<4x256xi1>
    %61 = arith.extui %60 : vector<4x256xi1> to vector<4x256xi32>
    %62 = arith.sitofp %61 : vector<4x256xi32> to vector<4x256xf32>
    %63 = arith.addf %48, %62 : vector<4x256xf32>
    %64 = vector.broadcast %52 : vector<1x256xf32> to vector<4x256xf32>
    %65 = arith.mulf %62, %64 : vector<4x256xf32>
    %66 = arith.addf %51, %65 : vector<4x256xf32>
    %67 = arith.mulf %63, %4 : vector<4x256xf32>
    %cst_2 = arith.constant 1.000000e+00 : f32
    %68 = vector.broadcast %cst_2 : f32 to vector<4x256xf32>
    %69 = arith.subf %66, %68 : vector<4x256xf32>
    %70 = arith.cmpf ogt, %67, %69 : vector<4x256xf32>
    %71 = arith.extui %70 : vector<4x256xi1> to vector<4x256xi32>
    %72 = arith.sitofp %71 : vector<4x256xi32> to vector<4x256xf32>
    %cst_3 = arith.constant dense<0.000000e+00> : vector<256xf32>
    %73 = vector.multi_reduction <add>, %72, %cst_3 [0] : vector<4x256xf32> to vector<256xf32>
    %74 = vector.shape_cast %73 : vector<256xf32> to vector<1x256xf32>
    %cst_4 = arith.constant 0.000000e+00 : f32
    %75 = vector.broadcast %cst_4 : f32 to vector<4x256xf32>
    %76 = arith.select %70, %4, %75 : vector<4x256xi1>, vector<4x256xf32>
    %cst_5 = arith.constant dense<0.000000e+00> : vector<256xf32>
    %77 = vector.multi_reduction <add>, %76, %cst_5 [0] : vector<4x256xf32> to vector<256xf32>
    %78 = vector.shape_cast %77 : vector<256xf32> to vector<1x256xf32>
    %cst_6 = arith.constant 1.000000e+00 : f32
    %79 = vector.broadcast %cst_6 : f32 to vector<1x256xf32>
    %80 = arith.subf %78, %79 : vector<1x256xf32>
    %81 = arith.divf %80, %74 : vector<1x256xf32>
    %82 = vector.broadcast %81 : vector<1x256xf32> to vector<4x256xf32>
    %83 = arith.subf %4, %82 : vector<4x256xf32>
    %cst_7 = arith.constant 0.000000e+00 : f32
    %84 = vector.broadcast %cst_7 : f32 to vector<4x256xf32>
    %85 = arith.maximumf %83, %84 : vector<4x256xf32>
    %c0_8 = arith.constant 0 : index
    %c0_9 = arith.constant 0 : index
    %86 = vector.load %arg2[%c0_8, %c0_9] : memref<4x256xf32, #tpu.memory_space<vmem>>, vector<4x256xf32>
    tpu.vector_store %arg2[%c0_8, %c0_9], %85 {strides = array<i32>} : memref<4x256xf32, #tpu.memory_space<vmem>>, vector<4x256xf32>,
    return
  }
  func.func @transform_0(%arg0: i32) -> (i32, i32) {
    %c0_i32 = arith.constant 0 : i32
    %c0_i32_0 = arith.constant 0 : i32
    return %c0_i32, %arg0 : i32, i32
  }
  func.func @transform_1(%arg0: i32) -> (i32, i32) {
    %c0_i32 = arith.constant 0 : i32
    %c0_i32_0 = arith.constant 0 : i32
    return %c0_i32, %arg0 : i32, i32
  }
}

</mosaic_0001>

<llo_original>
// kernel: sparsemax_topk.1
$region0: #{sparsemax_topk.1}
  #allocation0 [shape = 'u32[]', space=smem, size = 0x4, offset = 0x4, fixed_abs, tag = 'smem constant byte address 0x4 - core index']
  #allocation1 [shape = 'u32[144,128]{1,0:T(1,128)}', space=vmem, size = 0x12000, scoped, tag = 'internal scratch']
  %s0 = inlined_call_operand.vmem [shape: f32[4,512], index: 0, kind: input, shape index: {}]
  %s1 = inlined_call_operand.vmem [shape: f32[4,512], index: 1, kind: output, shape index: {}]
  %s2 = sld [smem:[#allocation0]]
  $region37: #{sparsemax_topk.1} parent=0
    _
  %s4 = ssub.s32 1, %s2
  %s5 = scalar_select 0, %s4, %s2
  loop: start=0, step=1, limit=4
  $region2: #{sparsemax_topk.1} parent=0 // loop_pre_header
    _
  $region3: #{sparsemax_topk.1} parent=0 // loop_header
    %s7 = sphi 0, %s11
    %p8 = scmp.ge.s32.totalorder %s7, 4
    %s17 = sphi 0, %s19
    %s20 = sphi 0, %s17
    %s21 = sphi 0, %s20
    %s37 = sphi 0, %s21
    %s43 = sphi 0, %s45
    %s46 = sphi 0, %s43
    %s47 = sphi 0, %s46
    %s63 = sphi 0, %s47
  $region4: #{sparsemax_topk.1} parent=0 // loop_header_branch
    %10 = sbr.rel (%p8) target = $region8
  $region5: #{sparsemax_topk.1} parent=0 // loop_body
    %s12 = ssub.s32 %s7, 1
    %s13 = ssub.s32 %s7, 2
    %s14 = sadd.s32 %s7, 1
    %s15 = ssub.s32 %s7, %s14
    %p16 = scmp.eq.s32.totalorder %s15, 0
    %s18 = sadd.s32 %s17, 1
    %s19 = scalar_select %p16, %s17, %s18
    %p22 = pneg %p16
    %p23 = scmp.eq.s32.totalorder %s7, 1
    %p24 = por %p22, %p23
    %p25 = scmp.ne.s32.totalorder %s17, %s20
    %p26 = scmp.eq.s32.totalorder %s7, 0
    %p27 = por %p25, %p26
    %p28 = scmp.ne.s32.totalorder %s17, %s20
    %p29 = scmp.eq.s32.totalorder %s12, 1
    %p30 = por %p28, %p29
    %p31 = scmp.ne.s32.totalorder %s20, %s21
    %p32 = scmp.eq.s32.totalorder %s12, 0
    %p33 = por %p31, %p32
    %p34 = scmp.ne.s32.totalorder %s20, %s21
    %p35 = scmp.eq.s32.totalorder %s13, 1
    %p36 = por %p34, %p35
    %p38 = scmp.ne.s32.totalorder %s21, %s37
    %p39 = scmp.eq.s32.totalorder %s13, 0
    %p40 = por %p38, %p39
    %s41 = ssub.s32 %s7, %s14
    %p42 = scmp.eq.s32.totalorder %s41, 0
    %s44 = sadd.s32 %s43, 1
    %s45 = scalar_select %p42, %s43, %s44
    %p48 = pneg %p42
    %p49 = scmp.eq.s32.totalorder %s7, 1
    %p50 = por %p48, %p49
    %p51 = scmp.ne.s32.totalorder %s43, %s46
    %p52 = scmp.eq.s32.totalorder %s7, 0
    %p53 = por %p51, %p52
    %p54 = scmp.ne.s32.totalorder %s43, %s46
    %p55 = scmp.eq.s32.totalorder %s12, 1
    %p56 = por %p54, %p55
    %p57 = scmp.ne.s32.totalorder %s46, %s47
    %p58 = scmp.eq.s32.totalorder %s12, 0
    %p59 = por %p57, %p58
    %p60 = scmp.ne.s32.totalorder %s46, %s47
    %p61 = scmp.eq.s32.totalorder %s13, 1
    %p62 = por %p60, %p61
    %p64 = scmp.ne.s32.totalorder %s47, %s63
    %p65 = scmp.eq.s32.totalorder %s13, 0
    %p66 = por %p64, %p65
    %p67 = scmp.le.s32.totalorder 1, %s7
    %p68 = scmp.lt.s32.totalorder %s7, 3
    %p69 = pnand %p67, %p68
    %p70 = pneg %p69
    // Predicated region
    $region9: #{sparsemax_topk.1} parent=5 // pred_check
      _
    $region10: #{sparsemax_topk.1} parent=5 // pred_check_branch
      %72 = sbr.rel (%p69) target = $region12
    $region11: #{sparsemax_topk.1} parent=5 // pred_region
      %s73 = ssub.s32 %s7, 1
    $region12: #{sparsemax_topk.1} parent=5 // pred_fallthru
      _
    %p74 = scmp.lt.s32.totalorder %s7, 2
    // Predicated region
    $region13: #{sparsemax_topk.1} parent=5 // pred_check
      %p75 = pneg %p74
    $region14: #{sparsemax_topk.1} parent=5 // pred_check_branch
      %77 = sbr.rel (%p75) target = $region16
    $region15: #{sparsemax_topk.1} parent=5 // pred_region
      // Predicated region
      $region17: #{sparsemax_topk.1} parent=15 // pred_check
        %p78 = pneg %p27
      $region18: #{sparsemax_topk.1} parent=15 // pred_check_branch
        %80 = sbr.rel (%p78) target = $region20
      $region19: #{sparsemax_topk.1} parent=15 // pred_region
        %s81 = smul.u32 2, %s7
        %p82 = scmp.lt.s32.totalorder %s81, 3
        %s83 = scalar_select %p82, %s81, 3
        %s84 = smul.addr %s83, 4
        %s85 = scalar_lea.vmem %s0, %s84
        %s86 = smul.u32 2, %s7
      $region20: #{sparsemax_topk.1} parent=15 // pred_fallthru
        _
    $region16: #{sparsemax_topk.1} parent=5 // pred_fallthru
      _
    %p87 = scmp.le.s32.totalorder 1, %s7
    %p88 = scmp.lt.s32.totalorder %s7, 3
    %p89 = pnand %p87, %p88
    %p90 = pneg %p89
    // Predicated region
    $region21: #{sparsemax_topk.1} parent=5 // pred_check
      _
    $region22: #{sparsemax_topk.1} parent=5 // pred_check_branch
      %92 = sbr.rel (%p89) target = $region24
    $region23: #{sparsemax_topk.1} parent=5 // pred_region
      %s93 = ssub.s32 %s7, 1
      %s94 = smul.u32 2, %s12
      %p95 = scmp.lt.s32.totalorder %s94, 3
      %s96 = scalar_select %p95, %s94, 3
      %s97 = smul.addr %s96, 4
      %s98 = scalar_lea.vmem %s0, %s97
      %p99 = pneg %p33
      %p100 = pneg %p30
      %p101 = pneg %p59
      %p102 = pneg %p56
      %s103 = smul.u32 2, %s12
      %p104 = scmp.lt.s32.totalorder %s103, 3
      %s105 = scalar_select %p104, %s103, 3
      %s106 = smul.addr %s105, 4
      %s107 = scalar_lea.vmem %s1, %s106
      %s108 = smul.u32 2, %s12
      %p109 = scmp.lt.s32.totalorder %s108, 3
      %s110 = scalar_select %p109, %s108, 3
      %s111 = smul.addr %s110, 4
      %s112 = scalar_lea.vmem %s0, %s111
      %s113 = smul.u32 2, %s12
      %s114 = smul.u32 2, %s12
      %p115 = scmp.lt.s32.totalorder %s114, 3
      %s116 = scalar_select %p115, %s114, 3
      %s117 = smul.addr %s116, 4
      %s118 = scalar_lea.vmem %s1, %s117
      %s119 = smul.u32 2, %s12
      %v120 = vld [vmem:[%s112] sm:$0xff]
      %v122 = vcombine.high %v120, %v120
      %vm124 = vcmask 1043456
      %v125 = vsel %vm124, %v120, -inf
      %v126 = vrot.slane %v125, 4
      %v127 = vmax.f32 %v125, %v126
      %v128 = vrot.slane %v127, 2
      %v129 = vmax.f32 %v127, %v128
      %v130 = vrot.slane %v129, 1
      %v131 = vmax.f32 %v129, %v130
      %v132 = vsel %vm124, %v122, -inf
      %v133 = vrot.slane %v132, 4
      %v134 = vmax.f32 %v132, %v133
      %v135 = vrot.slane %v134, 2
      %v136 = vmax.f32 %v134, %v135
      %v137 = vrot.slane %v136, 1
      %v138 = vmax.f32 %v136, %v137
      %v141 = vcombine.low %v131, %v138
      %v143 = vsub.f32 %v120, %v141
      %v144 = vlaneseq
      %v145 = vshrl.u32 %v144, 7
      %v147 = vlaneseq
      %v148 = vshrl.u32 %v147, 7
      %v149 = vsub.s32 0, %v148
      %v150 = vrot.slane %v143, %v149
      %v151 = vlaneseq
      %v152 = vshrl.u32 %v151, 7
      %v153 = vsub.s32 4, %v152
      %v154 = vrot.slane %v143, %v153
      %v157 = vlaneseq
      %v158 = vshrl.u32 %v157, 7
      %v159 = vsub.s32 0, %v158
      %v160 = vrot.slane %v150, %v159
      %v161 = vlaneseq
      %v162 = vshrl.u32 %v161, 7
      %v163 = vsub.s32 0, %v162
      %v164 = vrot.slane %v154, %v163
      %v165 = vcombine.high %v143, %v143
      %vm167 = vcmp.gt.f32.partialorder %v160, %v143
      %vm168 = vcmp.gt.f32.partialorder %v164, %v165
      %vm169 = vcmp.eq.f32.partialorder %v160, %v143
      %vm170 = vcmp.eq.f32.partialorder %v164, %v165
      %vm171 = vcmp.gt.s32.totalorder %v145, 0
      %vm172 = vmand %vm169, %vm171
      %vm173 = vmand %vm170, %vm171
      %vm174 = vmor %vm167, %vm172
      %vm175 = vmor %vm168, %vm173
      %v176 = vsel %vm174, 1, 0
      %v177 = vsel %vm175, 1, 0
      %v178 = vcvt.s32.f32 %v176
      %v179 = vcvt.s32.f32 %v177
      %v180 = vadd.f32 %v178, 1.0
      %v181 = vadd.f32 %v179, 1.0
      %v182 = vmul.f32 %v178, %v160
      %v183 = vmul.f32 %v179, %v164
      %v186 = vcombine.low %v182, %v183
      %v188 = vadd.f32 %v143, %v186
      %v189 = vlaneseq
      %v190 = vshrl.u32 %v189, 7
      %v191 = vsub.s32 1, %v190
      %v192 = vrot.slane %v143, %v191
      %v193 = vlaneseq
      %v194 = vshrl.u32 %v193, 7
      %v195 = vsub.s32 5, %v194
      %v196 = vrot.slane %v143, %v195
      %v199 = vlaneseq
      %v200 = vshrl.u32 %v199, 7
      %v201 = vsub.s32 1, %v200
      %v202 = vrot.slane %v192, %v201
      %v203 = vlaneseq
      %v204 = vshrl.u32 %v203, 7
      %v205 = vsub.s32 1, %v204
      %v206 = vrot.slane %v196, %v205
      %vm207 = vcmp.gt.f32.partialorder %v202, %v143
      %vm208 = vcmp.gt.f32.partialorder %v206, %v165
      %vm209 = vcmp.eq.f32.partialorder %v202, %v143
      %vm210 = vcmp.eq.f32.partialorder %v206, %v165
      %vm211 = vcmp.gt.s32.totalorder %v145, 1
      %vm212 = vmand %vm209, %vm211
      %vm213 = vmand %vm210, %vm211
      %vm214 = vmor %vm207, %vm212
      %vm215 = vmor %vm208, %vm213
      %v216 = vsel %vm214, 1, 0
      %v217 = vsel %vm215, 1, 0
      %v218 = vcvt.s32.f32 %v216
      %v219 = vcvt.s32.f32 %v217
      %v220 = vadd.f32 %v180, %v218
      %v221 = vadd.f32 %v181, %v219
      %v222 = vmul.f32 %v218, %v202
      %v223 = vmul.f32 %v219, %v206
      %v226 = vcombine.low %v222, %v223
      %v228 = vadd.f32 %v188, %v226
      %v229 = vlaneseq
      %v230 = vshrl.u32 %v229, 7
      %v231 = vsub.s32 2, %v230
      %v232 = vrot.slane %v143, %v231
      %v233 = vlaneseq
      %v234 = vshrl.u32 %v233, 7
      %v235 = vsub.s32 6, %v234
      %v236 = vrot.slane %v143, %v235
      %v239 = vlaneseq
      %v240 = vshrl.u32 %v239, 7
      %v241 = vsub.s32 2, %v240
      %v242 = vrot.slane %v232, %v241
      %v243 = vlaneseq
      %v244 = vshrl.u32 %v243, 7
      %v245 = vsub.s32 2, %v244
      %v246 = vrot.slane %v236, %v245
      %vm247 = vcmp.gt.f32.partialorder %v242, %v143
      %vm248 = vcmp.gt.f32.partialorder %v246, %v165
      %vm249 = vcmp.eq.f32.partialorder %v242, %v143
      %vm250 = vcmp.eq.f32.partialorder %v246, %v165
      %vm251 = vcmp.gt.s32.totalorder %v145, 2
      %vm252 = vmand %vm249, %vm251
      %vm253 = vmand %vm250, %vm251
      %vm254 = vmor %vm247, %vm252
      %vm255 = vmor %vm248, %vm253
      %v256 = vsel %vm254, 1, 0
      %v257 = vsel %vm255, 1, 0
      %v258 = vcvt.s32.f32 %v256
      %v259 = vcvt.s32.f32 %v257
      %v260 = vadd.f32 %v220, %v258
      %v261 = vadd.f32 %v221, %v259
      %v262 = vmul.f32 %v258, %v242
      %v263 = vmul.f32 %v259, %v246
      %v266 = vcombine.low %v262, %v263
      %v268 = vadd.f32 %v228, %v266
      %v269 = vlaneseq
      %v270 = vshrl.u32 %v269, 7
      %v271 = vsub.s32 3, %v270
      %v272 = vrot.slane %v143, %v271
      %v273 = vlaneseq
      %v274 = vshrl.u32 %v273, 7
      %v275 = vsub.s32 7, %v274
      %v276 = vrot.slane %v143, %v275
      %v279 = vlaneseq
      %v280 = vshrl.u32 %v279, 7
      %v281 = vsub.s32 3, %v280
      %v282 = vrot.slane %v272, %v281
      %v283 = vlaneseq
      %v284 = vshrl.u32 %v283, 7
      %v285 = vsub.s32 3, %v284
      %v286 = vrot.slane %v276, %v285
      %vm287 = vcmp.gt.f32.partialorder %v282, %v143
      %vm288 = vcmp.gt.f32.partialorder %v286, %v165
      %vm289 = vcmp.eq.f32.partialorder %v282, %v143
      %vm290 = vcmp.eq.f32.partialorder %v286, %v165
      %vm291 = vcmp.gt.s32.totalorder %v145, 3
      %vm292 = vmand %vm289, %vm291
      %vm293 = vmand %vm290, %vm291
      %vm294 = vmor %vm287, %vm292
      %vm295 = vmor %vm288, %vm293
      %v296 = vsel %vm294, 1, 0
      %v297 = vsel %vm295, 1, 0
      %v298 = vcvt.s32.f32 %v296
      %v299 = vcvt.s32.f32 %v297
      %v300 = vadd.f32 %v260, %v298
      %v301 = vadd.f32 %v261, %v299
      %v302 = vmul.f32 %v298, %v282
      %v303 = vmul.f32 %v299, %v286
      %v306 = vcombine.low %v302, %v303
      %v308 = vadd.f32 %v268, %v306
      %v309 = vmul.f32 %v300, %v143
      %v310 = vmul.f32 %v301, %v165
      %v311 = vsub.f32 %v308, 1.0
      %v313 = vcombine.high %v311, %v311
      %vm315 = vcmp.gt.f32.partialorder %v309, %v311
      %vm316 = vcmp.gt.f32.partialorder %v310, %v313
      %v317 = vsel %vm315, 1, 0
      %v318 = vsel %vm316, 1, 0
      %v319 = vcvt.s32.f32 %v317
      %v320 = vcvt.s32.f32 %v318
      %v321 = vsel %vm124, %v319, 0.0
      %v322 = vrot.slane %v321, 4
      %v323 = vadd.f32 %v321, %v322
      %v324 = vrot.slane %v323, 2
      %v325 = vadd.f32 %v323, %v324
      %v326 = vrot.slane %v325, 1
      %v327 = vadd.f32 %v325, %v326
      %v328 = vsel %vm124, %v320, 0.0
      %v329 = vrot.slane %v328, 4
      %v330 = vadd.f32 %v328, %v329
      %v331 = vrot.slane %v330, 2
      %v332 = vadd.f32 %v330, %v331
      %v333 = vrot.slane %v332, 1
      %v334 = vadd.f32 %v332, %v333
      %v335 = vsel %vm315, %v143, 0.0
      %v336 = vsel %vm316, %v165, 0.0
      %v337 = vsel %vm124, %v335, 0.0
      %v338 = vrot.slane %v337, 4
      %v339 = vadd.f32 %v337, %v338
      %v340 = vrot.slane %v339, 2
      %v341 = vadd.f32 %v339, %v340
      %v342 = vrot.slane %v341, 1
      %v343 = vadd.f32 %v341, %v342
      %v344 = vsel %vm124, %v336, 0.0
      %v345 = vrot.slane %v344, 4
      %v346 = vadd.f32 %v344, %v345
      %v347 = vrot.slane %v346, 2
      %v348 = vadd.f32 %v346, %v347
      %v349 = vrot.slane %v348, 1
      %v350 = vadd.f32 %v348, %v349
      %v351 = vsub.f32 %v343, 1.0
      %v352 = vsub.f32 %v350, 1.0
      %v353 = vrcp.pop %v327
      %v354 = vmul.f32 %v351, %v353
      %v355 = vrcp.pop %v334
      %v356 = vmul.f32 %v352, %v355
      %v359 = vcombine.low %v354, %v356
      %v361 = vsub.f32 %v143, %v359
      %v362 = vmax.f32 %v361, 0.0
      %363 = vst [vmem:[%s118] sm:$0xff] %v362
      %s364 = smul.u32 2, %s12
      %p365 = scmp.lt.s32.totalorder %s364, 3
      %s366 = scalar_select %p365, %s364, 3
      %s367 = smul.addr %s366, 4
      %s368 = scalar_lea.vmem %s1, %s367
      // Predicated region
      $region25: #{sparsemax_topk.1} parent=23 // pred_check
        %p369 = pneg %p56
      $region26: #{sparsemax_topk.1} parent=23 // pred_check_branch
        %371 = sbr.rel (%p369) target = $region28
      $region27: #{sparsemax_topk.1} parent=23 // pred_region
        %s372 = smul.u32 2, %s12
      $region28: #{sparsemax_topk.1} parent=23 // pred_fallthru
        _
    $region24: #{sparsemax_topk.1} parent=5 // pred_fallthru
      _
    %p373 = scmp.le.s32.totalorder 2, %s7
    // Predicated region
    $region29: #{sparsemax_topk.1} parent=5 // pred_check
      %p374 = pneg %p373
    $region30: #{sparsemax_topk.1} parent=5 // pred_check_branch
      %376 = sbr.rel (%p374) target = $region32
    $region31: #{sparsemax_topk.1} parent=5 // pred_region
      %s377 = ssub.s32 %s7, 2
      // Predicated region
      $region33: #{sparsemax_topk.1} parent=31 // pred_check
        %p378 = pneg %p62
      $region34: #{sparsemax_topk.1} parent=31 // pred_check_branch
        %380 = sbr.rel (%p378) target = $region36
      $region35: #{sparsemax_topk.1} parent=31 // pred_region
        %s381 = smul.u32 2, %s13
        %p382 = scmp.lt.s32.totalorder %s381, 3
        %s383 = scalar_select %p382, %s381, 3
        %s384 = smul.addr %s383, 4
        %s385 = scalar_lea.vmem %s1, %s384
      $region36: #{sparsemax_topk.1} parent=31 // pred_fallthru
        _
    $region32: #{sparsemax_topk.1} parent=5 // pred_fallthru
      _
  $region6: #{sparsemax_topk.1} parent=0 // loop_footer
    %s11 = sadd.s32 1, %s7
  $region7: #{sparsemax_topk.1} parent=0 // loop_footer_branch
    %6 = sbr.rel target = $region3
  $region8: #{sparsemax_topk.1} parent=0 // loop_exit
    _

</llo_original>
